<compile_context>
chip_gen: v7x
topology: tpu7x:2x2x1
jax: 0.10.0
libtpu: 0.0.40
codegen_flags: <defaults>
</compile_context>

<pallas_src>
import math
from functools import partial

import jax
import jax.numpy as jnp
from jax.experimental import pallas as pl
from jax.experimental.pallas import tpu as pltpu

_LOG3 = math.log(3.0)
_SQRT_2PI = math.sqrt(2.0 * math.pi)
_MASK_BIAS = 1e30   # masked mat_2 entries -> exp() is exactly 0.0 in f32


def _round_up(n, m):
    return ((n + m - 1) // m) * m


# ---------------------------------------------------------------------------
# Fused kernel: prior + all GCN layers, everything VMEM / vreg resident
# ---------------------------------------------------------------------------
def _make_fused_kernel(batch, d, channels, d_pad, row_stride):
    """Static-shape kernel factory (batch, node count, channel chain baked in)."""
    n_layers = len(channels) - 1

    def kernel(x_ref, mat2_ref, params_ref, out_ref, prior_ref):
        # ---- prior: gaussian kernel + (pre-biased) mask + column normalize ----
        sigma_w = params_ref[0:d, 0:1]                          # (D, 1)
        sig = jax.nn.sigmoid(sigma_w * 5.0) + 1e-5
        sigma = jnp.exp(sig * _LOG3) - 1.0                      # 3**sig - 1
        inv_two_sig2 = 1.0 / (2.0 * sigma * sigma)              # O(D) divides
        inv_amp = 1.0 / (_SQRT_2PI * sigma)                     # O(D) divides
        # masked entries of mat2 were pre-biased to 1e30 -> this exp is exactly 0
        e = jnp.exp(-(mat2_ref[...]) * inv_two_sig2)            # (D, D) multiplies
        prior = e * inv_amp
        # diagonal is never masked (mat2 diag == 0) so every column sum > 0
        col_sum = jnp.sum(prior, axis=0, keepdims=True)         # (1, D)
        prior = prior * (1.0 / col_sum)                         # O(D) divides
        prior_ref[...] = prior

        # ---- GCN layers: batch folded into lanes, activations never leave VMEM ----
        if batch > 1:
            x = jnp.concatenate([x_ref[b] for b in range(batch)], axis=1)  # (D, B*Cin)
        else:
            x = x_ref[0]

        def apply_linear(x_dc, w_t, ci, co):
            # per-batch lane block (D, ci) @ W^T (ci, co); no block-diagonal kron
            ys = [jnp.dot(x_dc[:, b * ci:(b + 1) * ci], w_t,
                          preferred_element_type=jnp.float32)
                  for b in range(batch)]
            return ys[0] if batch == 1 else jnp.concatenate(ys, axis=1)

        ci = channels[0]
        for i in range(n_layers):                                # static unroll
            co = channels[i + 1]
            r0 = d_pad + i * row_stride
            w_t = params_ref[r0:r0 + ci, 0:co]                   # W_i^T  (ci, co)
            if co < ci:          # shrinking layer: linear first, DxD at narrower width
                x = apply_linear(x, w_t, ci, co)
                x = jnp.dot(prior, x, preferred_element_type=jnp.float32)
            else:                # (prior @ x) @ W^T
                x = jnp.dot(prior, x, preferred_element_type=jnp.float32)
                x = apply_linear(x, w_t, ci, co)
            x = jnp.maximum(x, 0.0)                              # relu
            ci = co

        # write output directly in (B, D, Cout) layout -- no wrapper transpose
        for b in range(batch):
            out_ref[b] = x[:, b * ci:(b + 1) * ci]

    return kernel


# ---------------------------------------------------------------------------
# One-time (module-__init__-style) preprocessing, outside the kernel
# ---------------------------------------------------------------------------
def prepare_params(mat2, mask, sigma_w, w_list, channels):
    """mat2: (D,D) squared dist; mask: (D,D) bool (off-diagonal zeros);
    sigma_w: (D,1); w_list: torch-layout (out, in) weights; channels: chain."""
    d = mat2.shape[0]
    n_layers = len(w_list)
    cmax = max(1, max(channels))
    d_pad = _round_up(d, 8)
    row_stride = _round_up(cmax, 8)

    mat2_b = jnp.where(mask, _MASK_BIAS, mat2).astype(jnp.float32)

    # single packed param buffer: rows [0, d) col 0 = sigma_w,
    # rows [d_pad + i*row_stride, +ci) cols [0, co) = W_i^T
    params = jnp.zeros((d_pad + n_layers * row_stride, cmax), jnp.float32)
    params = params.at[:d, 0:1].set(sigma_w.astype(jnp.float32))
    for i, w in enumerate(w_list):
        ci, co = channels[i], channels[i + 1]
        r0 = d_pad + i * row_stride
        params = params.at[r0:r0 + ci, :co].set(w.T.astype(jnp.float32))
    return mat2_b, params


# ---------------------------------------------------------------------------
# Forward wrapper: single fused pallas_call, zero host-side layout ops
# ---------------------------------------------------------------------------
@partial(jax.jit, static_argnames=("channels",))
def single_gcn_forward(x, mat2_b, params, *, channels):
    """x: (B, D, Cin) -> (out (B, D, Cout_last), prior (D, D))."""
    B, D, Cin = x.shape
    assert Cin == channels[0]
    cout = channels[-1]
    cmax = max(1, max(channels))
    d_pad = _round_up(D, 8)
    row_stride = _round_up(cmax, 8)

    kernel = _make_fused_kernel(B, D, channels, d_pad, row_stride)

    out, prior = pl.pallas_call(
        kernel,
        grid=(1,),                     # single fused step; at large D tile the
                                       # prior rows on a 'parallel' axis (v7x 2 TCs)
        in_specs=[
            pl.BlockSpec((B, D, Cin), lambda i: (0, 0, 0)),
            pl.BlockSpec((D, D), lambda i: (0, 0)),
            pl.BlockSpec(params.shape, lambda i: (0, 0)),
        ],
        out_specs=(
            pl.BlockSpec((B, D, cout), lambda i: (0, 0, 0)),
            pl.BlockSpec((D, D), lambda i: (0, 0)),
        ),
        out_shape=(
            jax.ShapeDtypeStruct((B, D, cout), jnp.float32),
            jax.ShapeDtypeStruct((D, D), jnp.float32),
        ),
        compiler_params=pltpu.CompilerParams(
            dimension_semantics=("arbitrary",),
        ),
    )(x, mat2_b, params)
    return out, prior


if __name__ == "__main__":
    key = jax.random.PRNGKey(0)
    B, D, Cin, Cout, n_layers = 2, 16, 4, 8, 2
    k1, k2, k3, k4, k5 = jax.random.split(key, 5)

    # deterministic symmetric distance matrix with zero diagonal
    coords = jax.random.uniform(k1, (D, 2), dtype=jnp.float32)
    diff = coords[:, None, :] - coords[None, :, :]
    dist = jnp.sqrt(jnp.sum(diff * diff, axis=-1))
    # force a couple of symmetric off-diagonal zeros so the mask path is exercised
    dist = dist.at[0, 3].set(0.0).at[3, 0].set(0.0)
    dist = dist.at[5, 7].set(0.0).at[7, 5].set(0.0)

    mat2 = (dist * dist).astype(jnp.float32)
    eye = jnp.eye(D, dtype=bool)
    mask = (dist == 0.0) & (~eye)            # generate_mask(): off-diagonal zeros

    # parameters (torch Linear weight layout (out, in)); the module constructs
    # n_layers+1 linears but forward only uses the first n_layers.
    sigma_w = jax.random.uniform(k2, (D, 1), minval=-1.0, maxval=1.0, dtype=jnp.float32)
    w0 = jax.random.normal(k3, (Cout, Cin), dtype=jnp.float32) * 0.5    # linears[0]
    w1 = jax.random.normal(k4, (Cout, Cout), dtype=jnp.float32) * 0.5   # linears[1]
    w_list = [w0, w1]
    channels = (Cin, Cout, Cout)             # per-layer in/out channel chain

    x = jax.random.normal(k5, (B, D, Cin), dtype=jnp.float32)

    mat2_b, params = prepare_params(mat2, mask, sigma_w, w_list, channels)
    out, prior = single_gcn_forward(x, mat2_b, params, channels=channels)
    out, prior = jax.block_until_ready((out, prior))

    # pure-JAX reference (explicit mask path, per-batch matmuls, exact divides)
    sig = jax.nn.sigmoid(sigma_w * 5.0) + 1e-5
    sig = 3.0 ** sig - 1.0
    e = jnp.exp(-mat2 / (2.0 * sig ** 2))
    pr = e / (math.sqrt(2.0 * math.pi) * sig)
    pr = jnp.where(mask, 0.0, pr)
    pr = pr / pr.sum(0)
    xr = x
    for w in w_list:
        xr = jax.nn.relu(jnp.einsum('ij,bjc->bic', pr, xr) @ w.T)

    assert jnp.allclose(prior, pr, atol=1e-5, rtol=1e-5), "prior mismatch"
    assert jnp.allclose(out, xr, atol=1e-5, rtol=1e-5), "output mismatch"
    print("KERNEL_OK")
</pallas_src>

<mosaic_0001>
module attributes {stable_mosaic.version = 11 : i64} {
  func.func @kernel(%arg0: i32, %arg1: memref<2x16x4xf32, #tpu.memory_space<vmem>>, %arg2: memref<16x16xf32, #tpu.memory_space<vmem>>, %arg3: memref<32x8xf32, #tpu.memory_space<vmem>>, %arg4: memref<2x16x8xf32, #tpu.memory_space<vmem>>, %arg5: memref<16x16xf32, #tpu.memory_space<vmem>>) attributes {dimension_semantics = [#tpu.dimension_semantics<arbitrary>], iteration_bounds = array<i64: 1>, scalar_prefetch = 0 : i64, scratch_operands = 0 : i64, tpu.core_type = #tpu.core_type<tc>, window_params = [{pipeline_mode = #tpu.pipeline_mode<synchronous>, transform_indices = @transform_0, window_bounds = array<i64: 2, 16, 4>}, {pipeline_mode = #tpu.pipeline_mode<synchronous>, transform_indices = @transform_1, window_bounds = array<i64: 16, 16>}, {pipeline_mode = #tpu.pipeline_mode<synchronous>, transform_indices = @transform_2, window_bounds = array<i64: 32, 8>}, {pipeline_mode = #tpu.pipeline_mode<synchronous>, transform_indices = @transform_3, window_bounds = array<i64: 2, 16, 8>}, {pipeline_mode = #tpu.pipeline_mode<synchronous>, transform_indices = @transform_4, window_bounds = array<i64: 16, 16>}]} {
    %c0 = arith.constant 0 : index
    %c0_0 = arith.constant 0 : index
    %0 = vector.load %arg3[%c0, %c0_0] : memref<32x8xf32, #tpu.memory_space<vmem>>, vector<16x1xf32>
    %cst = arith.constant 5.000000e+00 : f32
    %1 = vector.broadcast %cst : f32 to vector<16x1xf32>
    %2 = arith.mulf %0, %1 : vector<16x1xf32>
    %3 = arith.negf %2 : vector<16x1xf32>
    %4 = math.exp %3 : vector<16x1xf32>
    %cst_1 = arith.constant 1.000000e+00 : f32
    %5 = vector.broadcast %cst_1 : f32 to vector<16x1xf32>
    %6 = arith.addf %5, %4 : vector<16x1xf32>
    %7 = arith.divf %5, %6 : vector<16x1xf32>
    %cst_2 = arith.constant 9.99999974E-6 : f32
    %8 = vector.broadcast %cst_2 : f32 to vector<16x1xf32>
    %9 = arith.addf %7, %8 : vector<16x1xf32>
    %cst_3 = arith.constant 1.09861231 : f32
    %10 = vector.broadcast %cst_3 : f32 to vector<16x1xf32>
    %11 = arith.mulf %9, %10 : vector<16x1xf32>
    %12 = math.exp %11 : vector<16x1xf32>
    %cst_4 = arith.constant 1.000000e+00 : f32
    %13 = vector.broadcast %cst_4 : f32 to vector<16x1xf32>
    %14 = arith.subf %12, %13 : vector<16x1xf32>
    %cst_5 = arith.constant 2.000000e+00 : f32
    %15 = vector.broadcast %cst_5 : f32 to vector<16x1xf32>
    %16 = arith.mulf %15, %14 : vector<16x1xf32>
    %17 = arith.mulf %16, %14 : vector<16x1xf32>
    %cst_6 = arith.constant 1.000000e+00 : f32
    %18 = vector.broadcast %cst_6 : f32 to vector<16x1xf32>
    %19 = arith.divf %18, %17 : vector<16x1xf32>
    %cst_7 = arith.constant 2.50662827 : f32
    %20 = vector.broadcast %cst_7 : f32 to vector<16x1xf32>
    %21 = arith.mulf %20, %14 : vector<16x1xf32>
    %cst_8 = arith.constant 1.000000e+00 : f32
    %22 = vector.broadcast %cst_8 : f32 to vector<16x1xf32>
    %23 = arith.divf %22, %21 : vector<16x1xf32>
    %c0_9 = arith.constant 0 : index
    %c0_10 = arith.constant 0 : index
    %24 = vector.load %arg2[%c0_9, %c0_10] : memref<16x16xf32, #tpu.memory_space<vmem>>, vector<16x16xf32>
    %cst_11 = arith.constant 0.000000e+00 : f32
    %25 = vector.broadcast %cst_11 : f32 to vector<16x16xf32>
    %26 = arith.subf %25, %24 : vector<16x16xf32>
    %27 = vector.broadcast %19 : vector<16x1xf32> to vector<16x16xf32>
    %28 = arith.mulf %26, %27 : vector<16x16xf32>
    %29 = math.exp %28 : vector<16x16xf32>
    %30 = vector.broadcast %23 : vector<16x1xf32> to vector<16x16xf32>
    %31 = arith.mulf %29, %30 : vector<16x16xf32>
    %cst_12 = arith.constant dense<0.000000e+00> : vector<16xf32>
    %32 = vector.multi_reduction <add>, %31, %cst_12 [0] : vector<16x16xf32> to vector<16xf32>
    %33 = vector.shape_cast %32 : vector<16xf32> to vector<1x16xf32>
    %cst_13 = arith.constant 1.000000e+00 : f32
    %34 = vector.broadcast %cst_13 : f32 to vector<1x16xf32>
    %35 = arith.divf %34, %33 : vector<1x16xf32>
    %36 = vector.broadcast %35 : vector<1x16xf32> to vector<16x16xf32>
    %37 = arith.mulf %31, %36 : vector<16x16xf32>
    %c0_14 = arith.constant 0 : index
    %c0_15 = arith.constant 0 : index
    %38 = vector.load %arg5[%c0_14, %c0_15] : memref<16x16xf32, #tpu.memory_space<vmem>>, vector<16x16xf32>
    tpu.vector_store %arg5[%c0_14, %c0_15], %37 {strides = array<i32>} : memref<16x16xf32, #tpu.memory_space<vmem>>, vector<16x16xf32>,
    %c0_16 = arith.constant 0 : index
    %c0_17 = arith.constant 0 : index
    %c0_18 = arith.constant 0 : index
    %39 = vector.load %arg1[%c0_16, %c0_17, %c0_18] : memref<2x16x4xf32, #tpu.memory_space<vmem>>, vector<1x16x4xf32>
    %40 = vector.shape_cast %39 : vector<1x16x4xf32> to vector<16x4xf32>
    %c1 = arith.constant 1 : index
    %c0_19 = arith.constant 0 : index
    %c0_20 = arith.constant 0 : index
    %41 = vector.load %arg1[%c1, %c0_19, %c0_20] : memref<2x16x4xf32, #tpu.memory_space<vmem>>, vector<1x16x4xf32>
    %42 = vector.shape_cast %41 : vector<1x16x4xf32> to vector<16x4xf32>
    %43 = tpu.concatenate %40, %42 in 1 : vector<16x4xf32>, vector<16x4xf32> -> vector<16x8xf32>
    %c16 = arith.constant 16 : index
    %c0_21 = arith.constant 0 : index
    %44 = vector.load %arg3[%c16, %c0_21] : memref<32x8xf32, #tpu.memory_space<vmem>>, vector<4x8xf32>
    %cst_22 = arith.constant dense<0.000000e+00> : vector<16x8xf32>
    %45 = tpu.matmul %37, %43, %cst_22 {dimension_numbers = #tpu.dot_dimension_numbers<[1], [0], [0], [1], [0, 0, 1, 1], [], []>} : vector<16x16xf32>, vector<16x8xf32>, vector<16x8xf32> -> vector<16x8xf32>
    %46 = vector.extract_strided_slice %45 {offsets = [0, 0], sizes = [16, 4], strides = [1, 1]} : vector<16x8xf32> to vector<16x4xf32>
    %cst_23 = arith.constant dense<0.000000e+00> : vector<16x8xf32>
    %47 = tpu.matmul %46, %44, %cst_23 {dimension_numbers = #tpu.dot_dimension_numbers<[1], [0], [0], [1], [0, 0, 1, 1], [], []>} : vector<16x4xf32>, vector<4x8xf32>, vector<16x8xf32> -> vector<16x8xf32>
    %48 = vector.extract_strided_slice %45 {offsets = [0, 4], sizes = [16, 4], strides = [1, 1]} : vector<16x8xf32> to vector<16x4xf32>
    %cst_24 = arith.constant dense<0.000000e+00> : vector<16x8xf32>
    %49 = tpu.matmul %48, %44, %cst_24 {dimension_numbers = #tpu.dot_dimension_numbers<[1], [0], [0], [1], [0, 0, 1, 1], [], []>} : vector<16x4xf32>, vector<4x8xf32>, vector<16x8xf32> -> vector<16x8xf32>
    %50 = tpu.concatenate %47, %49 in 1 : vector<16x8xf32>, vector<16x8xf32> -> vector<16x16xf32>
    %cst_25 = arith.constant 0.000000e+00 : f32
    %51 = vector.broadcast %cst_25 : f32 to vector<16x16xf32>
    %52 = arith.maximumf %50, %51 : vector<16x16xf32>
    %c24 = arith.constant 24 : index
    %c0_26 = arith.constant 0 : index
    %53 = vector.load %arg3[%c24, %c0_26] : memref<32x8xf32, #tpu.memory_space<vmem>>, vector<8x8xf32>
    %cst_27 = arith.constant dense<0.000000e+00> : vector<16x16xf32>
    %54 = tpu.matmul %37, %52, %cst_27 {dimension_numbers = #tpu.dot_dimension_numbers<[1], [0], [0], [1], [0, 0, 1, 1], [], []>} : vector<16x16xf32>, vector<16x16xf32>, vector<16x16xf32> -> vector<16x16xf32>
    %55 = vector.extract_strided_slice %54 {offsets = [0, 0], sizes = [16, 8], strides = [1, 1]} : vector<16x16xf32> to vector<16x8xf32>
    %cst_28 = arith.constant dense<0.000000e+00> : vector<16x8xf32>
    %56 = tpu.matmul %55, %53, %cst_28 {dimension_numbers = #tpu.dot_dimension_numbers<[1], [0], [0], [1], [0, 0, 1, 1], [], []>} : vector<16x8xf32>, vector<8x8xf32>, vector<16x8xf32> -> vector<16x8xf32>
    %57 = vector.extract_strided_slice %54 {offsets = [0, 8], sizes = [16, 8], strides = [1, 1]} : vector<16x16xf32> to vector<16x8xf32>
    %cst_29 = arith.constant dense<0.000000e+00> : vector<16x8xf32>
    %58 = tpu.matmul %57, %53, %cst_29 {dimension_numbers = #tpu.dot_dimension_numbers<[1], [0], [0], [1], [0, 0, 1, 1], [], []>} : vector<16x8xf32>, vector<8x8xf32>, vector<16x8xf32> -> vector<16x8xf32>
    %59 = tpu.concatenate %56, %58 in 1 : vector<16x8xf32>, vector<16x8xf32> -> vector<16x16xf32>
    %cst_30 = arith.constant 0.000000e+00 : f32
    %60 = vector.broadcast %cst_30 : f32 to vector<16x16xf32>
    %61 = arith.maximumf %59, %60 : vector<16x16xf32>
    %62 = vector.extract_strided_slice %61 {offsets = [0, 0], sizes = [16, 8], strides = [1, 1]} : vector<16x16xf32> to vector<16x8xf32>
    %c0_31 = arith.constant 0 : index
    %c0_32 = arith.constant 0 : index
    %c0_33 = arith.constant 0 : index
    %63 = vector.load %arg4[%c0_31, %c0_32, %c0_33] : memref<2x16x8xf32, #tpu.memory_space<vmem>>, vector<1x16x8xf32>
    %64 = vector.shape_cast %63 : vector<1x16x8xf32> to vector<16x8xf32>
    %65 = vector.shape_cast %62 : vector<16x8xf32> to vector<1x16x8xf32>
    tpu.vector_store %arg4[%c0_31, %c0_32, %c0_33], %65 {strides = array<i32>} : memref<2x16x8xf32, #tpu.memory_space<vmem>>, vector<1x16x8xf32>,
    %66 = vector.extract_strided_slice %61 {offsets = [0, 8], sizes = [16, 8], strides = [1, 1]} : vector<16x16xf32> to vector<16x8xf32>
    %c1_34 = arith.constant 1 : index
    %c0_35 = arith.constant 0 : index
    %c0_36 = arith.constant 0 : index
    %67 = vector.load %arg4[%c1_34, %c0_35, %c0_36] : memref<2x16x8xf32, #tpu.memory_space<vmem>>, vector<1x16x8xf32>
    %68 = vector.shape_cast %67 : vector<1x16x8xf32> to vector<16x8xf32>
    %69 = vector.shape_cast %66 : vector<16x8xf32> to vector<1x16x8xf32>
    tpu.vector_store %arg4[%c1_34, %c0_35, %c0_36], %69 {strides = array<i32>} : memref<2x16x8xf32, #tpu.memory_space<vmem>>, vector<1x16x8xf32>,
    return
  }
  func.func @transform_0(%arg0: i32) -> (i32, i32, i32) {
    %c0_i32 = arith.constant 0 : i32
    %c0_i32_0 = arith.constant 0 : i32
    %c0_i32_1 = arith.constant 0 : i32
    %c0_i32_2 = arith.constant 0 : i32
    return %c0_i32, %c0_i32_0, %c0_i32_1 : i32, i32, i32
  }
  func.func @transform_1(%arg0: i32) -> (i32, i32) {
    %c0_i32 = arith.constant 0 : i32
    %c0_i32_0 = arith.constant 0 : i32
    %c0_i32_1 = arith.constant 0 : i32
    return %c0_i32, %c0_i32_0 : i32, i32
  }
  func.func @transform_2(%arg0: i32) -> (i32, i32) {
    %c0_i32 = arith.constant 0 : i32
    %c0_i32_0 = arith.constant 0 : i32
    %c0_i32_1 = arith.constant 0 : i32
    return %c0_i32, %c0_i32_0 : i32, i32
  }
  func.func @transform_3(%arg0: i32) -> (i32, i32, i32) {
    %c0_i32 = arith.constant 0 : i32
    %c0_i32_0 = arith.constant 0 : i32
    %c0_i32_1 = arith.constant 0 : i32
    %c0_i32_2 = arith.constant 0 : i32
    return %c0_i32, %c0_i32_0, %c0_i32_1 : i32, i32, i32
  }
  func.func @transform_4(%arg0: i32) -> (i32, i32) {
    %c0_i32 = arith.constant 0 : i32
    %c0_i32_0 = arith.constant 0 : i32
    %c0_i32_1 = arith.constant 0 : i32
    return %c0_i32, %c0_i32_0 : i32, i32
  }
}

</mosaic_0001>

<llo_original>
// kernel: single_gcn_forward.1
$region0: #{single_gcn_forward.1}
  #allocation0 [shape = 'u32[]', space=smem, size = 0x4, offset = 0x4, fixed_abs, tag = 'smem constant byte address 0x4 - core index']
  #allocation1 [shape = 'u32[144,128]{1,0:T(1,128)}', space=vmem, size = 0x12000, scoped, tag = 'internal scratch']
  %s0 = inlined_call_operand.vmem [shape: f32[2,16,4], index: 0, kind: input, shape index: {}]
  %s1 = inlined_call_operand.vmem [shape: f32[16,16], index: 1, kind: input, shape index: {}]
  %s2 = inlined_call_operand.vmem [shape: f32[32,8], index: 2, kind: input, shape index: {}]
  %s3 = inlined_call_operand.vmem [shape: f32[2,16,8], index: 3, kind: output, shape index: {0}]
  %s4 = inlined_call_operand.hbm [shape: f32[16,16], index: 4, kind: output, shape index: {1}]
  %5 = xla_tuple %s3, %s4
  %s6 = sld [smem:[#allocation0]]
  $region30: #{single_gcn_forward.1} parent=0
    _
  %s8 = ssub.s32 1, %s6
  %s9 = scalar_select 0, %s8, %s6
  $region1: #{single_gcn_forward.1} parent=0
    #allocation2 [shape = 'u8[8192]{0}', space=vmem, size = 0x2000, scoped, tag = 'output window, operand 1, single buffered']
    #allocation3 [shape = 's32[1]{0}', space=sflag, size = 0x4, scoped, tag = 'scoped memory for single_gcn_forward.1']
    %10 = vsyncpa [#allocation3], 0
    // Predicated region
    $region2: #{single_gcn_forward.1} parent=1 // pred_check
      _
    $region3: #{single_gcn_forward.1} parent=1 // pred_check_branch
      %12 = sbr.rel (0) target = $region5
    $region4: #{single_gcn_forward.1} parent=1 // pred_region
      _
    $region5: #{single_gcn_forward.1} parent=1 // pred_fallthru
      _
    // Predicated region
    $region6: #{single_gcn_forward.1} parent=1 // pred_check
      _
    $region7: #{single_gcn_forward.1} parent=1 // pred_check_branch
      %14 = sbr.rel (0) target = $region9
    $region8: #{single_gcn_forward.1} parent=1 // pred_region
      _
    $region9: #{single_gcn_forward.1} parent=1 // pred_fallthru
      _
    // Predicated region
    $region10: #{single_gcn_forward.1} parent=1 // pred_check
      _
    $region11: #{single_gcn_forward.1} parent=1 // pred_check_branch
      %16 = sbr.rel (0) target = $region13
    $region12: #{single_gcn_forward.1} parent=1 // pred_region
      _
    $region13: #{single_gcn_forward.1} parent=1 // pred_fallthru
      _
    %v17 = vld [vmem:[%s2] sm:$0xff]
    %v18 = vld [vmem:[%s2 + $0x8] sm:$0xff]
    %v19 = vmul.f32 %v17, 5.0
    %v20 = vmul.f32 %v18, 5.0
    %v21 = vxor.u32 %v19, 2147483648
    %v22 = vxor.u32 %v20, 2147483648
    %v23 = vmul.f32 %v21, 1.442695
    %v24 = vpow.pop %v23
    %v25 = vmul.f32 %v22, 1.442695
    %v26 = vpow.pop %v25
    %v27 = vadd.f32 %v24, 1.0
    %v28 = vadd.f32 %v26, 1.0
    %v29 = vrcp.pop %v27
    %v30 = vmul.f32 1.0, %v29
    %v31 = vrcp.pop %v28
    %v32 = vmul.f32 1.0, %v31
    %v33 = vadd.f32 %v30, 1e-05
    %v34 = vadd.f32 %v32, 1e-05
    %v35 = vmul.f32 %v33, 1.0986123
    %v36 = vmul.f32 %v34, 1.0986123
    %v37 = vmul.f32 %v35, 1.442695
    %v38 = vpow.pop %v37
    %v39 = vmul.f32 %v36, 1.442695
    %v40 = vpow.pop %v39
    %v41 = vsub.f32 %v38, 1.0
    %v42 = vsub.f32 %v40, 1.0
    %v43 = vmul.f32 %v41, 2.0
    %v44 = vmul.f32 %v42, 2.0
    %v45 = vmul.f32 %v43, %v41
    %v46 = vmul.f32 %v44, %v42
    %v47 = vrcp.pop %v45
    %v48 = vmul.f32 1.0, %v47
    %v49 = vrcp.pop %v46
    %v50 = vmul.f32 1.0, %v49
    %v51 = vmul.f32 %v41, 2.5066283
    %v52 = vmul.f32 %v42, 2.5066283
    %v53 = vrcp.pop %v51
    %v54 = vmul.f32 1.0, %v53
    %v55 = vrcp.pop %v52
    %v56 = vmul.f32 1.0, %v55
    %v57 = vld [vmem:[%s1] sm:$0xff]
    %v58 = vld [vmem:[%s1 + $0x8] sm:$0xff]
    %v59 = vsub.f32 0.0, %v57
    %v60 = vsub.f32 0.0, %v58
    %62 = vset.pattern.permute.xlu0 0
    %63 = vperm.xlu0 %62, %v48
    %v64 = vpop.permute.xlu0 %63
    %67 = vset.pattern.permute.xlu0 0
    %68 = vperm.xlu0 %67, %v50
    %v69 = vpop.permute.xlu0 %68
    %v71 = vmul.f32 %v59, %v64
    %v72 = vmul.f32 %v60, %v69
    %v73 = vmul.f32 %v71, 1.442695
    %v74 = vpow.pop %v73
    %v75 = vmul.f32 %v72, 1.442695
    %v76 = vpow.pop %v75
    %78 = vset.pattern.permute.xlu0 0
    %79 = vperm.xlu0 %78, %v54
    %v80 = vpop.permute.xlu0 %79
    %83 = vset.pattern.permute.xlu0 0
    %84 = vperm.xlu0 %83, %v56
    %v85 = vpop.permute.xlu0 %84
    %v87 = vmul.f32 %v74, %v80
    %v88 = vmul.f32 %v76, %v85
    %vm89 = vcmask 130048
    %v90 = vsel %vm89, %v87, 0.0
    %v91 = vsel %vm89, %v88, 0.0
    %v92 = vadd.f32 %v90, %v91
    %v93 = vrot.slane %v92, 4
    %v94 = vadd.f32 %v92, %v93
    %v95 = vrot.slane %v94, 2
    %v96 = vadd.f32 %v94, %v95
    %v97 = vrot.slane %v96, 1
    %v98 = vadd.f32 %v96, %v97
    %v99 = vrcp.pop %v98
    %v100 = vmul.f32 1.0, %v99
    %v101 = vmul.f32 %v87, %v100
    %v102 = vmul.f32 %v88, %v100
    %103 = vst.msk [vmem:[#allocation2] sm:$0xff] %vm89, %v101
    %104 = vst.msk [vmem:[#allocation2 + $0x8] sm:$0xff] %vm89, %v102
    %v105 = vld [vmem:[%s0] sm:$0xff]
    %v106 = vld [vmem:[%s0 + $0x8] sm:$0xff]
    %s107 = scalar_lea.vmem %s0, 16
    %v108 = vld [vmem:[%s107] sm:$0xff]
    %v109 = vld [vmem:[%s107 + $0x8] sm:$0xff]
    %112 = vrot.lane.b32.xlu0 %v108, 4
    %v113 = vpop.permute.xlu0 %112
    %114 = vrot.lane.b32.xlu0 %v109, 4
    %v115 = vpop.permute.xlu0 %114
    %vm118 = vcmask 31744
    %v119 = vsel %vm118, %v105, %v113
    %v120 = vsel %vm118, %v106, %v115
    %v121 = vld [vmem:[%s2 + $0x10] sm:$0xf]
    %v123 = vsel %vm89, %v101, 0
    %v126 = vsel %vm89, %v102, 0
    %128 = vmatprep.subr.mxu0 0.0
    %129 = vmatpush1.msra.mxu0 %v119
    %130 = vmatprep.subr.mxu0 0.0
    %131 = vmatpush1.msra.mxu0 %v120
    %132 = vmatprep.subr.mxu0 0.0
    %133 = vmatpush1.msra.mxu0 0.0
    %134 = vmatprep.subr.mxu0 0.0
    %135 = vmatpush1.msra.mxu0 0.0
    %136 = vmatprep.subr.mxu0 0.0
    %137 = vmatpush1.msra.mxu0 0.0
    %138 = vmatprep.subr.mxu0 0.0
    %139 = vmatpush1.msra.mxu0 0.0
    %140 = vmatprep.subr.mxu0 0.0
    %141 = vmatpush1.msra.mxu0 0.0
    %142 = vmatprep.subr.mxu0 0.0
    %143 = vmatpush1.msra.mxu0 0.0
    %144 = vmatprep.subr.mxu0 0.0
    %145 = vmatpush1.msra.mxu0 0.0
    %146 = vmatprep.subr.mxu0 0.0
    %147 = vmatpush1.msra.mxu0 0.0
    %148 = vmatprep.subr.mxu0 0.0
    %149 = vmatpush1.msra.mxu0 0.0
    %150 = vmatprep.subr.mxu0 0.0
    %151 = vmatpush1.msra.mxu0 0.0
    %152 = vmatprep.subr.mxu0 0.0
    %153 = vmatpush1.msra.mxu0 0.0
    %154 = vmatprep.subr.mxu0 0.0
    %155 = vmatpush1.msra.mxu0 0.0
    %156 = vmatprep.subr.mxu0 0.0
    %157 = vmatpush1.msra.mxu0 0.0
    %158 = vmatprep.subr.mxu0 0.0
    %159 = vmatpush1.msra.mxu0 0.0
    %160 = vmatprep.subr.mxu0 0.0
    %161 = vmatpush1.msra.mxu0 0.0
    %162 = vmatprep.subr.mxu0 0.0
    %163 = vmatpush1.msra.mxu0 0.0
    %164 = vmatprep.subr.mxu0 0.0
    %165 = vmatpush1.msra.mxu0 0.0
    %166 = vmatprep.subr.mxu0 0.0
    %167 = vmatpush1.msra.mxu0 0.0
    %168 = vmatprep.subr.mxu0 0.0
    %169 = vmatpush1.msra.mxu0 0.0
    %170 = vmatprep.subr.mxu0 0.0
    %171 = vmatpush1.msra.mxu0 0.0
    %172 = vmatprep.subr.mxu0 0.0
    %173 = vmatpush1.msra.mxu0 0.0
    %174 = vmatprep.subr.mxu0 0.0
    %175 = vmatpush1.msra.mxu0 0.0
    %176 = vmatprep.subr.mxu0 0.0
    %177 = vmatpush1.msra.mxu0 0.0
    %178 = vmatprep.subr.mxu0 0.0
    %179 = vmatpush1.msra.mxu0 0.0
    %180 = vmatprep.subr.mxu0 0.0
    %181 = vmatpush1.msra.mxu0 0.0
    %182 = vmatprep.subr.mxu0 0.0
    %183 = vmatpush1.msra.mxu0 0.0
    %184 = vmatprep.subr.mxu0 0.0
    %185 = vmatpush1.msra.mxu0 0.0
    %186 = vmatprep.subr.mxu0 0.0
    %187 = vmatpush1.msra.mxu0 0.0
    %188 = vmatprep.subr.mxu0 0.0
    %189 = vmatpush1.msra.mxu0 0.0
    %190 = vmatprep.subr.mxu0 0.0
    %191 = vmatpush1.msra.mxu0 0.0
    %192 = vmatprep.mubr.f32.mxu0 0.0
    %193 = vmatmul.mubr.f32.gmra.mrb[0].mxu0 %v123
    %v194 = vpop.f32.mrb[0].mxu0
    %v195 = vadd.f32 0.0, %v194
    %v196 = vpop.f32.mrb[0].mxu0
    %197 = vmatprep.mubr.f32.mxu0 0.0
    %198 = vmatmul.mubr.f32.gmra.mrb[0].mxu0 %v126
    %v199 = vpop.f32.mrb[0].mxu0
    %v200 = vadd.f32 0.0, %v199
    %v201 = vpop.f32.mrb[0].mxu0
    %202 = vdwg.mxu0
    %v204 = vsel %vm118, %v195, 0
    %v207 = vsel %vm118, %v200, 0
    %vm209 = vcmask 1043456
    %v211 = vsel %vm209, %v121, 0
    %213 = vmatprep.subr.mxu0 0.0
    %214 = vmatpush1.msra.mxu0 %v211
    %215 = vmatprep.subr.mxu0 0.0
    %216 = vmatpush1.msra.mxu0 0.0
    %217 = vmatprep.subr.mxu0 0.0
    %218 = vmatpush1.msra.mxu0 0.0
    %219 = vmatprep.subr.mxu0 0.0
    %220 = vmatpush1.msra.mxu0 0.0
    %221 = vmatprep.subr.mxu0 0.0
    %222 = vmatpush1.msra.mxu0 0.0
    %223 = vmatprep.subr.mxu0 0.0
    %224 = vmatpush1.msra.mxu0 0.0
    %225 = vmatprep.subr.mxu0 0.0
    %226 = vmatpush1.msra.mxu0 0.0
    %227 = vmatprep.subr.mxu0 0.0
    %228 = vmatpush1.msra.mxu0 0.0
    %229 = vmatprep.subr.mxu0 0.0
    %230 = vmatpush1.msra.mxu0 0.0
    %231 = vmatprep.subr.mxu0 0.0
    %232 = vmatpush1.msra.mxu0 0.0
    %233 = vmatprep.subr.mxu0 0.0
    %234 = vmatpush1.msra.mxu0 0.0
    %235 = vmatprep.subr.mxu0 0.0
    %236 = vmatpush1.msra.mxu0 0.0
    %237 = vmatprep.subr.mxu0 0.0
    %238 = vmatpush1.msra.mxu0 0.0
    %239 = vmatprep.subr.mxu0 0.0
    %240 = vmatpush1.msra.mxu0 0.0
    %241 = vmatprep.subr.mxu0 0.0
    %242 = vmatpush1.msra.mxu0 0.0
    %243 = vmatprep.subr.mxu0 0.0
    %244 = vmatpush1.msra.mxu0 0.0
    %245 = vmatprep.subr.mxu0 0.0
    %246 = vmatpush1.msra.mxu0 0.0
    %247 = vmatprep.subr.mxu0 0.0
    %248 = vmatpush1.msra.mxu0 0.0
    %249 = vmatprep.subr.mxu0 0.0
    %250 = vmatpush1.msra.mxu0 0.0
    %251 = vmatprep.subr.mxu0 0.0
    %252 = vmatpush1.msra.mxu0 0.0
    %253 = vmatprep.subr.mxu0 0.0
    %254 = vmatpush1.msra.mxu0 0.0
    %255 = vmatprep.subr.mxu0 0.0
    %256 = vmatpush1.msra.mxu0 0.0
    %257 = vmatprep.subr.mxu0 0.0
    %258 = vmatpush1.msra.mxu0 0.0
    %259 = vmatprep.subr.mxu0 0.0
    %260 = vmatpush1.msra.mxu0 0.0
    %261 = vmatprep.subr.mxu0 0.0
    %262 = vmatpush1.msra.mxu0 0.0
    %263 = vmatprep.subr.mxu0 0.0
    %264 = vmatpush1.msra.mxu0 0.0
    %265 = vmatprep.subr.mxu0 0.0
    %266 = vmatpush1.msra.mxu0 0.0
    %267 = vmatprep.subr.mxu0 0.0
    %268 = vmatpush1.msra.mxu0 0.0
    %269 = vmatprep.subr.mxu0 0.0
    %270 = vmatpush1.msra.mxu0 0.0
    %271 = vmatprep.subr.mxu0 0.0
    %272 = vmatpush1.msra.mxu0 0.0
    %273 = vmatprep.subr.mxu0 0.0
    %274 = vmatpush1.msra.mxu0 0.0
    %275 = vmatprep.subr.mxu0 0.0
    %276 = vmatpush1.msra.mxu0 0.0
    %277 = vmatprep.mubr.f32.mxu0 0.0
    %278 = vmatmul.mubr.f32.gmra.mrb[0].mxu0 %v204
    %v279 = vpop.f32.mrb[0].mxu0
    %v280 = vadd.f32 0.0, %v279
    %v281 = vpop.f32.mrb[0].mxu0
    %282 = vmatprep.mubr.f32.mxu0 0.0
    %283 = vmatmul.mubr.f32.gmra.mrb[0].mxu0 %v207
    %v284 = vpop.f32.mrb[0].mxu0
    %v285 = vadd.f32 0.0, %v284
    %v286 = vpop.f32.mrb[0].mxu0
    %287 = vdwg.mxu0
    %288 = vrot.lane.b32.xlu0 %v195, 124
    %v289 = vpop.permute.xlu0 %288
    %290 = vrot.lane.b32.xlu0 %v200, 124
    %v291 = vpop.permute.xlu0 %290
    %v292 = vsel %vm118, %v289, 0
    %v294 = vsel %vm118, %v291, 0
    %296 = vmatprep.subr.mxu0 0.0
    %297 = vmatpush1.msra.mxu0 %v211
    %298 = vmatprep.subr.mxu0 0.0
    %299 = vmatpush1.msra.mxu0 0.0
    %300 = vmatprep.subr.mxu0 0.0
    %301 = vmatpush1.msra.mxu0 0.0
    %302 = vmatprep.subr.mxu0 0.0
    %303 = vmatpush1.msra.mxu0 0.0
    %304 = vmatprep.subr.mxu0 0.0
    %305 = vmatpush1.msra.mxu0 0.0
    %306 = vmatprep.subr.mxu0 0.0
    %307 = vmatpush1.msra.mxu0 0.0
    %308 = vmatprep.subr.mxu0 0.0
    %309 = vmatpush1.msra.mxu0 0.0
    %310 = vmatprep.subr.mxu0 0.0
    %311 = vmatpush1.msra.mxu0 0.0
    %312 = vmatprep.subr.mxu0 0.0
    %313 = vmatpush1.msra.mxu0 0.0
    %314 = vmatprep.subr.mxu0 0.0
    %315 = vmatpush1.msra.mxu0 0.0
    %316 = vmatprep.subr.mxu0 0.0
    %317 = vmatpush1.msra.mxu0 0.0
    %318 = vmatprep.subr.mxu0 0.0
    %319 = vmatpush1.msra.mxu0 0.0
    %320 = vmatprep.subr.mxu0 0.0
    %321 = vmatpush1.msra.mxu0 0.0
    %322 = vmatprep.subr.mxu0 0.0
    %323 = vmatpush1.msra.mxu0 0.0
    %324 = vmatprep.subr.mxu0 0.0
    %325 = vmatpush1.msra.mxu0 0.0
    %326 = vmatprep.subr.mxu0 0.0
    %327 = vmatpush1.msra.mxu0 0.0
    %328 = vmatprep.subr.mxu0 0.0
    %329 = vmatpush1.msra.mxu0 0.0
    %330 = vmatprep.subr.mxu0 0.0
    %331 = vmatpush1.msra.mxu0 0.0
    %332 = vmatprep.subr.mxu0 0.0
    %333 = vmatpush1.msra.mxu0 0.0
    %334 = vmatprep.subr.mxu0 0.0
    %335 = vmatpush1.msra.mxu0 0.0
    %336 = vmatprep.subr.mxu0 0.0
    %337 = vmatpush1.msra.mxu0 0.0
    %338 = vmatprep.subr.mxu0 0.0
    %339 = vmatpush1.msra.mxu0 0.0
    %340 = vmatprep.subr.mxu0 0.0
    %341 = vmatpush1.msra.mxu0 0.0
    %342 = vmatprep.subr.mxu0 0.0
    %343 = vmatpush1.msra.mxu0 0.0
    %344 = vmatprep.subr.mxu0 0.0
    %345 = vmatpush1.msra.mxu0 0.0
    %346 = vmatprep.subr.mxu0 0.0
    %347 = vmatpush1.msra.mxu0 0.0
    %348 = vmatprep.subr.mxu0 0.0
    %349 = vmatpush1.msra.mxu0 0.0
    %350 = vmatprep.subr.mxu0 0.0
    %351 = vmatpush1.msra.mxu0 0.0
    %352 = vmatprep.subr.mxu0 0.0
    %353 = vmatpush1.msra.mxu0 0.0
    %354 = vmatprep.subr.mxu0 0.0
    %355 = vmatpush1.msra.mxu0 0.0
    %356 = vmatprep.subr.mxu0 0.0
    %357 = vmatpush1.msra.mxu0 0.0
    %358 = vmatprep.subr.mxu0 0.0
    %359 = vmatpush1.msra.mxu0 0.0
    %360 = vmatprep.mubr.f32.mxu0 0.0
    %361 = vmatmul.mubr.f32.gmra.mrb[0].mxu0 %v292
    %v362 = vpop.f32.mrb[0].mxu0
    %v363 = vadd.f32 0.0, %v362
    %v364 = vpop.f32.mrb[0].mxu0
    %365 = vmatprep.mubr.f32.mxu0 0.0
    %366 = vmatmul.mubr.f32.gmra.mrb[0].mxu0 %v294
    %v367 = vpop.f32.mrb[0].mxu0
    %v368 = vadd.f32 0.0, %v367
    %v369 = vpop.f32.mrb[0].mxu0
    %370 = vdwg.mxu0
    %373 = vrot.lane.b32.xlu0 %v363, 8
    %v374 = vpop.permute.xlu0 %373
    %375 = vrot.lane.b32.xlu0 %v368, 8
    %v376 = vpop.permute.xlu0 %375
    %vm379 = vcmask 64512
    %v380 = vsel %vm379, %v280, %v374
    %v381 = vsel %vm379, %v285, %v376
    %v382 = vmax.f32 %v380, 0.0
    %v383 = vmax.f32 %v381, 0.0
    %v384 = vld [vmem:[%s2 + $0x18] sm:$0xff]
    %385 = vmatprep.subr.mxu0 0.0
    %386 = vmatpush1.msra.mxu0 %v382
    %387 = vmatprep.subr.mxu0 0.0
    %388 = vmatpush1.msra.mxu0 %v383
    %389 = vmatprep.subr.mxu0 0.0
    %390 = vmatpush1.msra.mxu0 0.0
    %391 = vmatprep.subr.mxu0 0.0
    %392 = vmatpush1.msra.mxu0 0.0
    %393 = vmatprep.subr.mxu0 0.0
    %394 = vmatpush1.msra.mxu0 0.0
    %395 = vmatprep.subr.mxu0 0.0
    %396 = vmatpush1.msra.mxu0 0.0
    %397 = vmatprep.subr.mxu0 0.0
    %398 = vmatpush1.msra.mxu0 0.0
    %399 = vmatprep.subr.mxu0 0.0
    %400 = vmatpush1.msra.mxu0 0.0
    %401 = vmatprep.subr.mxu0 0.0
    %402 = vmatpush1.msra.mxu0 0.0
    %403 = vmatprep.subr.mxu0 0.0
    %404 = vmatpush1.msra.mxu0 0.0
    %405 = vmatprep.subr.mxu0 0.0
    %406 = vmatpush1.msra.mxu0 0.0
    %407 = vmatprep.subr.mxu0 0.0
    %408 = vmatpush1.msra.mxu0 0.0
    %409 = vmatprep.subr.mxu0 0.0
    %410 = vmatpush1.msra.mxu0 0.0
    %411 = vmatprep.subr.mxu0 0.0
    %412 = vmatpush1.msra.mxu0 0.0
    %413 = vmatprep.subr.mxu0 0.0
    %414 = vmatpush1.msra.mxu0 0.0
    %415 = vmatprep.subr.mxu0 0.0
    %416 = vmatpush1.msra.mxu0 0.0
    %417 = vmatprep.subr.mxu0 0.0
    %418 = vmatpush1.msra.mxu0 0.0
    %419 = vmatprep.subr.mxu0 0.0
    %420 = vmatpush1.msra.mxu0 0.0
    %421 = vmatprep.subr.mxu0 0.0
    %422 = vmatpush1.msra.mxu0 0.0
    %423 = vmatprep.subr.mxu0 0.0
    %424 = vmatpush1.msra.mxu0 0.0
    %425 = vmatprep.subr.mxu0 0.0
    %426 = vmatpush1.msra.mxu0 0.0
    %427 = vmatprep.subr.mxu0 0.0
    %428 = vmatpush1.msra.mxu0 0.0
    %429 = vmatprep.subr.mxu0 0.0
    %430 = vmatpush1.msra.mxu0 0.0
    %431 = vmatprep.subr.mxu0 0.0
    %432 = vmatpush1.msra.mxu0 0.0
    %433 = vmatprep.subr.mxu0 0.0
    %434 = vmatpush1.msra.mxu0 0.0
    %435 = vmatprep.subr.mxu0 0.0
    %436 = vmatpush1.msra.mxu0 0.0
    %437 = vmatprep.subr.mxu0 0.0
    %438 = vmatpush1.msra.mxu0 0.0
    %439 = vmatprep.subr.mxu0 0.0
    %440 = vmatpush1.msra.mxu0 0.0
    %441 = vmatprep.subr.mxu0 0.0
    %442 = vmatpush1.msra.mxu0 0.0
    %443 = vmatprep.subr.mxu0 0.0
    %444 = vmatpush1.msra.mxu0 0.0
    %445 = vmatprep.subr.mxu0 0.0
    %446 = vmatpush1.msra.mxu0 0.0
    %447 = vmatprep.subr.mxu0 0.0
    %448 = vmatpush1.msra.mxu0 0.0
    %449 = vmatprep.mubr.f32.mxu0 0.0
    %450 = vmatmul.mubr.f32.gmra.mrb[0].mxu0 %v123
    %v451 = vpop.f32.mrb[0].mxu0
    %v452 = vadd.f32 0.0, %v451
    %v453 = vpop.f32.mrb[0].mxu0
    %454 = vmatprep.mubr.f32.mxu0 0.0
    %455 = vmatmul.mubr.f32.gmra.mrb[0].mxu0 %v126
    %v456 = vpop.f32.mrb[0].mxu0
    %v457 = vadd.f32 0.0, %v456
    %v458 = vpop.f32.mrb[0].mxu0
    %459 = vdwg.mxu0
    %v461 = vsel %vm379, %v452, 0
    %v464 = vsel %vm379, %v457, 0
    %466 = vmatprep.subr.mxu0 0.0
    %467 = vmatpush1.msra.mxu0 %v384
    %468 = vmatprep.subr.mxu0 0.0
    %469 = vmatpush1.msra.mxu0 0.0
    %470 = vmatprep.subr.mxu0 0.0
    %471 = vmatpush1.msra.mxu0 0.0
    %472 = vmatprep.subr.mxu0 0.0
    %473 = vmatpush1.msra.mxu0 0.0
    %474 = vmatprep.subr.mxu0 0.0
    %475 = vmatpush1.msra.mxu0 0.0
    %476 = vmatprep.subr.mxu0 0.0
    %477 = vmatpush1.msra.mxu0 0.0
    %478 = vmatprep.subr.mxu0 0.0
    %479 = vmatpush1.msra.mxu0 0.0
    %480 = vmatprep.subr.mxu0 0.0
    %481 = vmatpush1.msra.mxu0 0.0
    %482 = vmatprep.subr.mxu0 0.0
    %483 = vmatpush1.msra.mxu0 0.0
    %484 = vmatprep.subr.mxu0 0.0
    %485 = vmatpush1.msra.mxu0 0.0
    %486 = vmatprep.subr.mxu0 0.0
    %487 = vmatpush1.msra.mxu0 0.0
    %488 = vmatprep.subr.mxu0 0.0
    %489 = vmatpush1.msra.mxu0 0.0
    %490 = vmatprep.subr.mxu0 0.0
    %491 = vmatpush1.msra.mxu0 0.0
    %492 = vmatprep.subr.mxu0 0.0
    %493 = vmatpush1.msra.mxu0 0.0
    %494 = vmatprep.subr.mxu0 0.0
    %495 = vmatpush1.msra.mxu0 0.0
    %496 = vmatprep.subr.mxu0 0.0
    %497 = vmatpush1.msra.mxu0 0.0
    %498 = vmatprep.subr.mxu0 0.0
    %499 = vmatpush1.msra.mxu0 0.0
    %500 = vmatprep.subr.mxu0 0.0
    %501 = vmatpush1.msra.mxu0 0.0
    %502 = vmatprep.subr.mxu0 0.0
    %503 = vmatpush1.msra.mxu0 0.0
    %504 = vmatprep.subr.mxu0 0.0
    %505 = vmatpush1.msra.mxu0 0.0
    %506 = vmatprep.subr.mxu0 0.0
    %507 = vmatpush1.msra.mxu0 0.0
    %508 = vmatprep.subr.mxu0 0.0
    %509 = vmatpush1.msra.mxu0 0.0
    %510 = vmatprep.subr.mxu0 0.0
    %511 = vmatpush1.msra.mxu0 0.0
    %512 = vmatprep.subr.mxu0 0.0
    %513 = vmatpush1.msra.mxu0 0.0
    %514 = vmatprep.subr.mxu0 0.0
    %515 = vmatpush1.msra.mxu0 0.0
    %516 = vmatprep.subr.mxu0 0.0
    %517 = vmatpush1.msra.mxu0 0.0
    %518 = vmatprep.subr.mxu0 0.0
    %519 = vmatpush1.msra.mxu0 0.0
    %520 = vmatprep.subr.mxu0 0.0
    %521 = vmatpush1.msra.mxu0 0.0
    %522 = vmatprep.subr.mxu0 0.0
    %523 = vmatpush1.msra.mxu0 0.0
    %524 = vmatprep.subr.mxu0 0.0
    %525 = vmatpush1.msra.mxu0 0.0
    %526 = vmatprep.subr.mxu0 0.0
    %527 = vmatpush1.msra.mxu0 0.0
    %528 = vmatprep.subr.mxu0 0.0
    %529 = vmatpush1.msra.mxu0 0.0
    %530 = vmatprep.mubr.f32.mxu0 0.0
    %531 = vmatmul.mubr.f32.gmra.mrb[0].mxu0 %v461
    %v532 = vpop.f32.mrb[0].mxu0
    %v533 = vadd.f32 0.0, %v532
    %v534 = vpop.f32.mrb[0].mxu0
    %535 = vmatprep.mubr.f32.mxu0 0.0
    %536 = vmatmul.mubr.f32.gmra.mrb[0].mxu0 %v464
    %v537 = vpop.f32.mrb[0].mxu0
    %v538 = vadd.f32 0.0, %v537
    %v539 = vpop.f32.mrb[0].mxu0
    %540 = vdwg.mxu0
    %541 = vrot.lane.b32.xlu0 %v452, 120
    %v542 = vpop.permute.xlu0 %541
    %543 = vrot.lane.b32.xlu0 %v457, 120
    %v544 = vpop.permute.xlu0 %543
    %v545 = vsel %vm379, %v542, 0
    %v547 = vsel %vm379, %v544, 0
    %549 = vmatprep.subr.mxu0 0.0
    %550 = vmatpush1.msra.mxu0 %v384
    %551 = vmatprep.subr.mxu0 0.0
    %552 = vmatpush1.msra.mxu0 0.0
    %553 = vmatprep.subr.mxu0 0.0
    %554 = vmatpush1.msra.mxu0 0.0
    %555 = vmatprep.subr.mxu0 0.0
    %556 = vmatpush1.msra.mxu0 0.0
    %557 = vmatprep.subr.mxu0 0.0
    %558 = vmatpush1.msra.mxu0 0.0
    %559 = vmatprep.subr.mxu0 0.0
    %560 = vmatpush1.msra.mxu0 0.0
    %561 = vmatprep.subr.mxu0 0.0
    %562 = vmatpush1.msra.mxu0 0.0
    %563 = vmatprep.subr.mxu0 0.0
    %564 = vmatpush1.msra.mxu0 0.0
    %565 = vmatprep.subr.mxu0 0.0
    %566 = vmatpush1.msra.mxu0 0.0
    %567 = vmatprep.subr.mxu0 0.0
    %568 = vmatpush1.msra.mxu0 0.0
    %569 = vmatprep.subr.mxu0 0.0
    %570 = vmatpush1.msra.mxu0 0.0
    %571 = vmatprep.subr.mxu0 0.0
    %572 = vmatpush1.msra.mxu0 0.0
    %573 = vmatprep.subr.mxu0 0.0
    %574 = vmatpush1.msra.mxu0 0.0
    %575 = vmatprep.subr.mxu0 0.0
    %576 = vmatpush1.msra.mxu0 0.0
    %577 = vmatprep.subr.mxu0 0.0
    %578 = vmatpush1.msra.mxu0 0.0
    %579 = vmatprep.subr.mxu0 0.0
    %580 = vmatpush1.msra.mxu0 0.0
    %581 = vmatprep.subr.mxu0 0.0
    %582 = vmatpush1.msra.mxu0 0.0
    %583 = vmatprep.subr.mxu0 0.0
    %584 = vmatpush1.msra.mxu0 0.0
    %585 = vmatprep.subr.mxu0 0.0
    %586 = vmatpush1.msra.mxu0 0.0
    %587 = vmatprep.subr.mxu0 0.0
    %588 = vmatpush1.msra.mxu0 0.0
    %589 = vmatprep.subr.mxu0 0.0
    %590 = vmatpush1.msra.mxu0 0.0
    %591 = vmatprep.subr.mxu0 0.0
    %592 = vmatpush1.msra.mxu0 0.0
    %593 = vmatprep.subr.mxu0 0.0
    %594 = vmatpush1.msra.mxu0 0.0
    %595 = vmatprep.subr.mxu0 0.0
    %596 = vmatpush1.msra.mxu0 0.0
    %597 = vmatprep.subr.mxu0 0.0
    %598 = vmatpush1.msra.mxu0 0.0
    %599 = vmatprep.subr.mxu0 0.0
    %600 = vmatpush1.msra.mxu0 0.0
    %601 = vmatprep.subr.mxu0 0.0
    %602 = vmatpush1.msra.mxu0 0.0
    %603 = vmatprep.subr.mxu0 0.0
    %604 = vmatpush1.msra.mxu0 0.0
    %605 = vmatprep.subr.mxu0 0.0
    %606 = vmatpush1.msra.mxu0 0.0
    %607 = vmatprep.subr.mxu0 0.0
    %608 = vmatpush1.msra.mxu0 0.0
    %609 = vmatprep.subr.mxu0 0.0
    %610 = vmatpush1.msra.mxu0 0.0
    %611 = vmatprep.subr.mxu0 0.0
    %612 = vmatpush1.msra.mxu0 0.0
    %613 = vmatprep.mubr.f32.mxu0 0.0
    %614 = vmatmul.mubr.f32.gmra.mrb[0].mxu0 %v545
    %v615 = vpop.f32.mrb[0].mxu0
    %v616 = vadd.f32 0.0, %v615
    %v617 = vpop.f32.mrb[0].mxu0
    %618 = vmatprep.mubr.f32.mxu0 0.0
    %619 = vmatmul.mubr.f32.gmra.mrb[0].mxu0 %v547
    %v620 = vpop.f32.mrb[0].mxu0
    %v621 = vadd.f32 0.0, %v620
    %v622 = vpop.f32.mrb[0].mxu0
    %623 = vdwg.mxu0
    %626 = vrot.lane.b32.xlu0 %v616, 8
    %v627 = vpop.permute.xlu0 %626
    %628 = vrot.lane.b32.xlu0 %v621, 8
    %v629 = vpop.permute.xlu0 %628
    %v632 = vsel %vm379, %v533, %v627
    %v633 = vsel %vm379, %v538, %v629
    %v634 = vmax.f32 %v632, 0.0
    %v635 = vmax.f32 %v633, 0.0
    %636 = vst.msk [vmem:[%s3] sm:$0xff] %vm379, %v634
    %637 = vst.msk [vmem:[%s3 + $0x8] sm:$0xff] %vm379, %v635
    %640 = vrot.lane.b32.xlu0 %v634, 120
    %v641 = vpop.permute.xlu0 %640
    %642 = vrot.lane.b32.xlu0 %v635, 120
    %v643 = vpop.permute.xlu0 %642
    %s646 = scalar_lea.vmem %s3, 16
    %647 = vst.msk [vmem:[%s646] sm:$0xff] %vm379, %v641
    %648 = vst.msk [vmem:[%s646 + $0x8] sm:$0xff] %vm379, %v643
    // Predicated region
    $region14: #{single_gcn_forward.1} parent=1 // pred_check
      _
    $region15: #{single_gcn_forward.1} parent=1 // pred_check_branch
      %650 = sbr.rel (0) target = $region17
    $region16: #{single_gcn_forward.1} parent=1 // pred_region
      _
    $region17: #{single_gcn_forward.1} parent=1 // pred_fallthru
      _
    // Predicated region
    $region18: #{single_gcn_forward.1} parent=1 // pred_check
      _
    $region19: #{single_gcn_forward.1} parent=1 // pred_check_branch
      %652 = sbr.rel (0) target = $region21
    $region20: #{single_gcn_forward.1} parent=1 // pred_region
      %s654 = ssub.s32 256, 256
      %655 = vsyncadd [#allocation3], %s654
      %s656 = sshll.u32 [#allocation2], 4
      %s657 = int_to_ptr.vmem [resolvable:$true] %s656
      %662 = dma.vmem_to_hbm [thread:$0]  %s657, 256, %s4, [#allocation3], 128, 128, 8
    $region21: #{single_gcn_forward.1} parent=1 // pred_fallthru
      _
    // Predicated region
    $region22: #{single_gcn_forward.1} parent=1 // pred_check
      _
    $region23: #{single_gcn_forward.1} parent=1 // pred_check_branch
      %664 = sbr.rel (0) target = $region25
    $region24: #{single_gcn_forward.1} parent=1 // pred_region
      _
    $region25: #{single_gcn_forward.1} parent=1 // pred_fallthru
      _
    // Predicated region
    $region26: #{single_gcn_forward.1} parent=1 // pred_check
      _
    $region27: #{single_gcn_forward.1} parent=1 // pred_check_branch
      %666 = sbr.rel (0) target = $region29
    $region28: #{single_gcn_forward.1} parent=1 // pred_region
      %667 = dma.done [#allocation3], 256
    $region29: #{single_gcn_forward.1} parent=1 // pred_fallthru
      _
    %668 = vsyncpa [#allocation3], 1

</llo_original>
